<compile_context>
chip_gen: v5e
topology: v5e:2x2
jax: 0.10.0
libtpu: 0.0.40
codegen_flags: <defaults>
</compile_context>

<pallas_src>
import functools

import jax
import jax.numpy as jnp
from jax.experimental import pallas as pl
from jax.experimental.pallas import tpu as pltpu

# Lane-dense padded working dims (multiples of the (8, 128) vreg tile).
VOCAB_PAD = 128
E_PAD = 128
H_PAD = 128
OUT_PAD = 128
T_PAD = 128       # time axis padded to lane width so one iota serves both uses
SUBLANE = 8


# ----------------------------------------------------------------------------
# Fused Pallas kernel: lens -> last-token gather -> embedding -> encoder -> clf
# ----------------------------------------------------------------------------
def _fused_kernel(len_total, padding_idx,
                  seq_ref, emb_ref, w_enc_ref, b_enc_ref,
                  w1_ref, b1_ref, w2_ref, b2_ref,
                  out_ref):
    seq = seq_ref[...]                                        # (b_pad, T_PAD) i32
    lane = jax.lax.broadcasted_iota(jnp.int32, seq.shape, 1)  # shared 0..127 iota
    valid = lane < len_total

    # lens[b] = len_total - #padding tokens  (identical to the PyTorch model).
    is_pad = jnp.logical_and(seq == padding_idx, valid)
    lens = len_total - jnp.sum(is_pad.astype(jnp.int32), axis=1, keepdims=True)
    # reps index lens-1; all-padding rows wrap to the last timestep, matching
    # PyTorch's output[-1] negative-index behavior.
    last_idx = jnp.where(lens > 0, lens - 1, len_total - 1)   # (b_pad, 1)

    # Gather the token id at the last valid timestep: select + lane reduce.
    sel = jnp.logical_and(lane == last_idx, valid)
    tok = jnp.sum(jnp.where(sel, seq, 0), axis=1, keepdims=True)   # (b_pad, 1)

    # Embedding lookup as one-hot @ table — a single MXU matmul.
    one_hot = (lane == tok).astype(jnp.float32)               # (b_pad, VOCAB_PAD)
    x = jnp.dot(one_hot, emb_ref[...], preferred_element_type=jnp.float32)

    # Encoder projection on the b_pad needed rows only.
    h = jnp.tanh(
        jnp.dot(x, w_enc_ref[...], preferred_element_type=jnp.float32)
        + b_enc_ref[...])

    # Classifier: Linear -> Sigmoid -> Linear, lane-dense (b_pad, 128) output.
    h1 = jax.nn.sigmoid(
        jnp.dot(h, w1_ref[...], preferred_element_type=jnp.float32)
        + b1_ref[...])
    out_ref[...] = (
        jnp.dot(h1, w2_ref[...], preferred_element_type=jnp.float32)
        + b2_ref[...])


def _full_spec(shape):
    rank = len(shape)
    return pl.BlockSpec(shape, lambda i: (0,) * rank)   # whole array, grid=(1,)


# ----------------------------------------------------------------------------
# Model forward: thin JAX wrapper around the single fused pallas_call
# ----------------------------------------------------------------------------
def model_forward(seq, padded_params, padding_idx=0):
    len_total, bsz = seq.shape
    assert len_total <= T_PAD
    b_pad = max(SUBLANE, -(-bsz // SUBLANE) * SUBLANE)

    # (T, B) -> lane-dense (B_pad, T_PAD); padded lanes/rows are padding tokens
    # (the kernel masks lanes >= len_total; padded batch rows are sliced away).
    seq_t = jnp.full((b_pad, T_PAD), padding_idx, dtype=jnp.int32)
    seq_t = seq_t.at[:bsz, :len_total].set(seq.astype(jnp.int32).T)

    p = padded_params
    ins = (seq_t, p["emb_table"], p["w_enc"], p["b_enc"],
           p["w1"], p["b1"], p["w2"], p["b2"])

    out_pad = pl.pallas_call(
        functools.partial(_fused_kernel, len_total, padding_idx),
        out_shape=jax.ShapeDtypeStruct((b_pad, OUT_PAD), jnp.float32),
        grid=(1,),
        in_specs=[_full_spec(a.shape) for a in ins],
        out_specs=_full_spec((b_pad, OUT_PAD)),
        compiler_params=pltpu.CompilerParams(
            dimension_semantics=("arbitrary",)),
    )(*ins)

    # Slice the lane-dense slab back to the real (bsz, 2) logits.
    return {"res_clf": out_pad[:bsz, :2]}


# ----------------------------------------------------------------------------
# Parameters (raw + zero-padded lane-dense copies) and a pure-JAX reference
# ----------------------------------------------------------------------------
def init_params(key, vocab=32, edim=32, hdim=32, padding_idx=0):
    ks = jax.random.split(key, 6)
    emb_table = jax.random.normal(ks[0], (vocab, edim), jnp.float32) * 0.1
    emb_table = emb_table.at[padding_idx].set(0.0)    # nn.Embedding padding_idx
    w_enc = jax.random.normal(ks[1], (edim, hdim), jnp.float32) * 0.1
    b_enc = jnp.zeros((1, hdim), jnp.float32)
    w1 = jax.random.normal(ks[2], (hdim, hdim), jnp.float32) * 0.1
    b1 = jax.random.normal(ks[3], (1, hdim), jnp.float32) * 0.01
    w2 = jax.random.normal(ks[4], (hdim, 2), jnp.float32) * 0.1
    b2 = jax.random.normal(ks[5], (1, 2), jnp.float32) * 0.01
    return {"emb_table": emb_table, "w_enc": w_enc, "b_enc": b_enc,
            "w1": w1, "b1": b1, "w2": w2, "b2": b2}


def _pad2(a, rows, cols):
    out = jnp.zeros((rows, cols), a.dtype)
    return out.at[: a.shape[0], : a.shape[1]].set(a)


def pad_params(p):
    # Zero padding is exact: padded hidden lanes stay 0 through tanh, and the
    # sigmoid(0)=0.5 padded lanes of the head multiply zero rows of padded w2.
    return {
        "emb_table": _pad2(p["emb_table"], VOCAB_PAD, E_PAD),
        "w_enc": _pad2(p["w_enc"], E_PAD, H_PAD),
        "b_enc": _pad2(p["b_enc"], 1, H_PAD),
        "w1": _pad2(p["w1"], H_PAD, H_PAD),
        "b1": _pad2(p["b1"], 1, H_PAD),
        "w2": _pad2(p["w2"], H_PAD, OUT_PAD),
        "b2": _pad2(p["b2"], 1, OUT_PAD),
    }


def reference_forward(seq, p, padding_idx=0):
    # Mirrors the PyTorch module line-for-line (pure jnp, unpadded weights).
    len_total, bsz = seq.shape
    mask = (seq == padding_idx)
    lens = len_total - jnp.sum(mask.astype(jnp.int32), axis=0)
    embs = jnp.take(p["emb_table"], seq, axis=0)                       # (T,B,E)
    output = jnp.tanh(jnp.einsum("tbe,eh->tbh", embs, p["w_enc"]) + p["b_enc"])
    reps = output[lens - 1, jnp.arange(bsz), :]                        # (B,H)
    h = jax.nn.sigmoid(reps @ p["w1"] + p["b1"])
    return h @ p["w2"] + p["b2"]


if __name__ == "__main__":
    key = jax.random.PRNGKey(0)
    pkey, skey = jax.random.split(key)

    vocab, edim, hdim = 32, 32, 32
    len_total, bsz = 8, 2
    padding_idx = 0

    raw_params = init_params(pkey, vocab=vocab, edim=edim, hdim=hdim,
                             padding_idx=padding_idx)
    padded_params = pad_params(raw_params)

    # Deterministic padded sequence batch: tokens in [1, vocab), trailing pads.
    seq = jax.random.randint(skey, (len_total, bsz), 1, vocab, dtype=jnp.int32)
    seq = seq.at[6:, 0].set(padding_idx)   # batch 0 has length 6
    seq = seq.at[5:, 1].set(padding_idx)   # batch 1 has length 5

    fwd = jax.jit(lambda s: model_forward(s, padded_params, padding_idx))
    out = fwd(seq)
    res = jax.block_until_ready(out["res_clf"])
    assert res.shape == (bsz, 2) and res.dtype == jnp.float32

    ref = jax.block_until_ready(
        reference_forward(seq, raw_params, padding_idx=padding_idx))
    assert jnp.allclose(res, ref, atol=1e-4, rtol=1e-4), (res, ref)

    print("KERNEL_OK")
</pallas_src>

<mosaic_0001>
module attributes {stable_mosaic.version = 11 : i64} {
  func.func @_fused_kernel(%arg0: i32, %arg1: memref<8x128xi32, #tpu.memory_space<vmem>>, %arg2: memref<128x128xf32, #tpu.memory_space<vmem>>, %arg3: memref<128x128xf32, #tpu.memory_space<vmem>>, %arg4: memref<1x128xf32, #tpu.memory_space<vmem>>, %arg5: memref<128x128xf32, #tpu.memory_space<vmem>>, %arg6: memref<1x128xf32, #tpu.memory_space<vmem>>, %arg7: memref<128x128xf32, #tpu.memory_space<vmem>>, %arg8: memref<1x128xf32, #tpu.memory_space<vmem>>, %arg9: memref<8x128xf32, #tpu.memory_space<vmem>>) attributes {dimension_semantics = [#tpu.dimension_semantics<arbitrary>], iteration_bounds = array<i64: 1>, scalar_prefetch = 0 : i64, scratch_operands = 0 : i64, tpu.core_type = #tpu.core_type<tc>, window_params = [{pipeline_mode = #tpu.pipeline_mode<synchronous>, transform_indices = @transform_0, window_bounds = array<i64: 8, 128>}, {pipeline_mode = #tpu.pipeline_mode<synchronous>, transform_indices = @transform_1, window_bounds = array<i64: 128, 128>}, {pipeline_mode = #tpu.pipeline_mode<synchronous>, transform_indices = @transform_2, window_bounds = array<i64: 128, 128>}, {pipeline_mode = #tpu.pipeline_mode<synchronous>, transform_indices = @transform_3, window_bounds = array<i64: 1, 128>}, {pipeline_mode = #tpu.pipeline_mode<synchronous>, transform_indices = @transform_4, window_bounds = array<i64: 128, 128>}, {pipeline_mode = #tpu.pipeline_mode<synchronous>, transform_indices = @transform_5, window_bounds = array<i64: 1, 128>}, {pipeline_mode = #tpu.pipeline_mode<synchronous>, transform_indices = @transform_6, window_bounds = array<i64: 128, 128>}, {pipeline_mode = #tpu.pipeline_mode<synchronous>, transform_indices = @transform_7, window_bounds = array<i64: 1, 128>}, {pipeline_mode = #tpu.pipeline_mode<synchronous>, transform_indices = @transform_8, window_bounds = array<i64: 8, 128>}]} {
    %c0 = arith.constant 0 : index
    %c0_0 = arith.constant 0 : index
    %0 = vector.load %arg1[%c0, %c0_0] : memref<8x128xi32, #tpu.memory_space<vmem>>, vector<8x128xi32>
    %1 = tpu.iota {dimensions = array<i32: 1>} : vector<8x128xi32>
    %c8_i32 = arith.constant 8 : i32
    %2 = vector.broadcast %c8_i32 : i32 to vector<8x128xi32>
    %3 = arith.cmpi slt, %1, %2 : vector<8x128xi32>
    %c0_i32 = arith.constant 0 : i32
    %4 = vector.broadcast %c0_i32 : i32 to vector<8x128xi32>
    %5 = arith.cmpi eq, %0, %4 : vector<8x128xi32>
    %6 = arith.andi %5, %3 : vector<8x128xi1>
    %7 = arith.extui %6 : vector<8x128xi1> to vector<8x128xi32>
    %cst = arith.constant dense<0> : vector<8xi32>
    %8 = vector.multi_reduction <add>, %7, %cst [1] : vector<8x128xi32> to vector<8xi32>
    %9 = vector.shape_cast %8 : vector<8xi32> to vector<8x1xi32>
    %c8_i32_1 = arith.constant 8 : i32
    %10 = vector.broadcast %c8_i32_1 : i32 to vector<8x1xi32>
    %11 = arith.subi %10, %9 : vector<8x1xi32>
    %c0_i32_2 = arith.constant 0 : i32
    %12 = vector.broadcast %c0_i32_2 : i32 to vector<8x1xi32>
    %13 = arith.cmpi sgt, %11, %12 : vector<8x1xi32>
    %c1_i32 = arith.constant 1 : i32
    %14 = vector.broadcast %c1_i32 : i32 to vector<8x1xi32>
    %15 = arith.subi %11, %14 : vector<8x1xi32>
    %c7_i32 = arith.constant 7 : i32
    %16 = vector.broadcast %c7_i32 : i32 to vector<8x1xi32>
    %17 = arith.select %13, %15, %16 : vector<8x1xi1>, vector<8x1xi32>
    %18 = vector.broadcast %17 : vector<8x1xi32> to vector<8x128xi32>
    %19 = arith.cmpi eq, %1, %18 : vector<8x128xi32>
    %20 = arith.andi %19, %3 : vector<8x128xi1>
    %c0_i32_3 = arith.constant 0 : i32
    %21 = vector.broadcast %c0_i32_3 : i32 to vector<8x128xi32>
    %22 = arith.select %20, %0, %21 : vector<8x128xi1>, vector<8x128xi32>
    %cst_4 = arith.constant dense<0> : vector<8xi32>
    %23 = vector.multi_reduction <add>, %22, %cst_4 [1] : vector<8x128xi32> to vector<8xi32>
    %24 = vector.shape_cast %23 : vector<8xi32> to vector<8x1xi32>
    %25 = vector.broadcast %24 : vector<8x1xi32> to vector<8x128xi32>
    %26 = arith.cmpi eq, %1, %25 : vector<8x128xi32>
    %27 = arith.extui %26 : vector<8x128xi1> to vector<8x128xi32>
    %28 = arith.sitofp %27 : vector<8x128xi32> to vector<8x128xf32>
    %c0_5 = arith.constant 0 : index
    %c0_6 = arith.constant 0 : index
    %29 = vector.load %arg2[%c0_5, %c0_6] : memref<128x128xf32, #tpu.memory_space<vmem>>, vector<128x128xf32>
    %cst_7 = arith.constant dense<0.000000e+00> : vector<8x128xf32>
    %30 = tpu.matmul %28, %29, %cst_7 {dimension_numbers = #tpu.dot_dimension_numbers<[1], [0], [0], [1], [0, 0, 1, 1], [], []>} : vector<8x128xf32>, vector<128x128xf32>, vector<8x128xf32> -> vector<8x128xf32>
    %c0_8 = arith.constant 0 : index
    %c0_9 = arith.constant 0 : index
    %31 = vector.load %arg3[%c0_8, %c0_9] : memref<128x128xf32, #tpu.memory_space<vmem>>, vector<128x128xf32>
    %cst_10 = arith.constant dense<0.000000e+00> : vector<8x128xf32>
    %32 = tpu.matmul %30, %31, %cst_10 {dimension_numbers = #tpu.dot_dimension_numbers<[1], [0], [0], [1], [0, 0, 1, 1], [], []>} : vector<8x128xf32>, vector<128x128xf32>, vector<8x128xf32> -> vector<8x128xf32>
    %c0_11 = arith.constant 0 : index
    %c0_12 = arith.constant 0 : index
    %33 = vector.load %arg4[%c0_11, %c0_12] : memref<1x128xf32, #tpu.memory_space<vmem>>, vector<1x128xf32>
    %34 = vector.broadcast %33 : vector<1x128xf32> to vector<8x128xf32>
    %35 = arith.addf %32, %34 : vector<8x128xf32>
    %36 = math.tanh %35 : vector<8x128xf32>
    %c0_13 = arith.constant 0 : index
    %c0_14 = arith.constant 0 : index
    %37 = vector.load %arg5[%c0_13, %c0_14] : memref<128x128xf32, #tpu.memory_space<vmem>>, vector<128x128xf32>
    %cst_15 = arith.constant dense<0.000000e+00> : vector<8x128xf32>
    %38 = tpu.matmul %36, %37, %cst_15 {dimension_numbers = #tpu.dot_dimension_numbers<[1], [0], [0], [1], [0, 0, 1, 1], [], []>} : vector<8x128xf32>, vector<128x128xf32>, vector<8x128xf32> -> vector<8x128xf32>
    %c0_16 = arith.constant 0 : index
    %c0_17 = arith.constant 0 : index
    %39 = vector.load %arg6[%c0_16, %c0_17] : memref<1x128xf32, #tpu.memory_space<vmem>>, vector<1x128xf32>
    %40 = vector.broadcast %39 : vector<1x128xf32> to vector<8x128xf32>
    %41 = arith.addf %38, %40 : vector<8x128xf32>
    %42 = arith.negf %41 : vector<8x128xf32>
    %43 = math.exp %42 : vector<8x128xf32>
    %cst_18 = arith.constant 1.000000e+00 : f32
    %44 = vector.broadcast %cst_18 : f32 to vector<8x128xf32>
    %45 = arith.addf %44, %43 : vector<8x128xf32>
    %46 = arith.divf %44, %45 : vector<8x128xf32>
    %c0_19 = arith.constant 0 : index
    %c0_20 = arith.constant 0 : index
    %47 = vector.load %arg7[%c0_19, %c0_20] : memref<128x128xf32, #tpu.memory_space<vmem>>, vector<128x128xf32>
    %cst_21 = arith.constant dense<0.000000e+00> : vector<8x128xf32>
    %48 = tpu.matmul %46, %47, %cst_21 {dimension_numbers = #tpu.dot_dimension_numbers<[1], [0], [0], [1], [0, 0, 1, 1], [], []>} : vector<8x128xf32>, vector<128x128xf32>, vector<8x128xf32> -> vector<8x128xf32>
    %c0_22 = arith.constant 0 : index
    %c0_23 = arith.constant 0 : index
    %49 = vector.load %arg8[%c0_22, %c0_23] : memref<1x128xf32, #tpu.memory_space<vmem>>, vector<1x128xf32>
    %50 = vector.broadcast %49 : vector<1x128xf32> to vector<8x128xf32>
    %51 = arith.addf %48, %50 : vector<8x128xf32>
    %c0_24 = arith.constant 0 : index
    %c0_25 = arith.constant 0 : index
    %52 = vector.load %arg9[%c0_24, %c0_25] : memref<8x128xf32, #tpu.memory_space<vmem>>, vector<8x128xf32>
    tpu.vector_store %arg9[%c0_24, %c0_25], %51 {strides = array<i32>} : memref<8x128xf32, #tpu.memory_space<vmem>>, vector<8x128xf32>,
    return
  }
  func.func @transform_0(%arg0: i32) -> (i32, i32) {
    %c0_i32 = arith.constant 0 : i32
    %c0_i32_0 = arith.constant 0 : i32
    %c0_i32_1 = arith.constant 0 : i32
    return %c0_i32, %c0_i32_0 : i32, i32
  }
  func.func @transform_1(%arg0: i32) -> (i32, i32) {
    %c0_i32 = arith.constant 0 : i32
    %c0_i32_0 = arith.constant 0 : i32
    %c0_i32_1 = arith.constant 0 : i32
    return %c0_i32, %c0_i32_0 : i32, i32
  }
  func.func @transform_2(%arg0: i32) -> (i32, i32) {
    %c0_i32 = arith.constant 0 : i32
    %c0_i32_0 = arith.constant 0 : i32
    %c0_i32_1 = arith.constant 0 : i32
    return %c0_i32, %c0_i32_0 : i32, i32
  }
  func.func @transform_3(%arg0: i32) -> (i32, i32) {
    %c0_i32 = arith.constant 0 : i32
    %c0_i32_0 = arith.constant 0 : i32
    %c0_i32_1 = arith.constant 0 : i32
    return %c0_i32, %c0_i32_0 : i32, i32
  }
  func.func @transform_4(%arg0: i32) -> (i32, i32) {
    %c0_i32 = arith.constant 0 : i32
    %c0_i32_0 = arith.constant 0 : i32
    %c0_i32_1 = arith.constant 0 : i32
    return %c0_i32, %c0_i32_0 : i32, i32
  }
  func.func @transform_5(%arg0: i32) -> (i32, i32) {
    %c0_i32 = arith.constant 0 : i32
    %c0_i32_0 = arith.constant 0 : i32
    %c0_i32_1 = arith.constant 0 : i32
    return %c0_i32, %c0_i32_0 : i32, i32
  }
  func.func @transform_6(%arg0: i32) -> (i32, i32) {
    %c0_i32 = arith.constant 0 : i32
    %c0_i32_0 = arith.constant 0 : i32
    %c0_i32_1 = arith.constant 0 : i32
    return %c0_i32, %c0_i32_0 : i32, i32
  }
  func.func @transform_7(%arg0: i32) -> (i32, i32) {
    %c0_i32 = arith.constant 0 : i32
    %c0_i32_0 = arith.constant 0 : i32
    %c0_i32_1 = arith.constant 0 : i32
    return %c0_i32, %c0_i32_0 : i32, i32
  }
  func.func @transform_8(%arg0: i32) -> (i32, i32) {
    %c0_i32 = arith.constant 0 : i32
    %c0_i32_0 = arith.constant 0 : i32
    %c0_i32_1 = arith.constant 0 : i32
    return %c0_i32, %c0_i32_0 : i32, i32
  }
}

</mosaic_0001>

<llo_original>
// kernel: _lambda_.1
$region0: #{_lambda_.1}
  #allocation0 [shape = 'u32[]', space=smem, size = 0x4, offset = 0x4, fixed_abs, tag = 'smem constant byte address 0x4 - core index']
  #allocation1 [shape = 'u32[72,128]{1,0:T(1,128)}', space=vmem, size = 0x9000, scoped, tag = 'internal scratch']
  %s0 = inlined_call_operand.vmem [shape: s32[8,128], index: 0, kind: input, shape index: {}]
  %s1 = inlined_call_operand.hbm [shape: f32[128,128], index: 1, kind: input, shape index: {}]
  %s2 = inlined_call_operand.hbm [shape: f32[128,128], index: 2, kind: input, shape index: {}]
  %s3 = inlined_call_operand.vmem [shape: f32[1,128], index: 3, kind: input, shape index: {}]
  %s4 = inlined_call_operand.hbm [shape: f32[128,128], index: 4, kind: input, shape index: {}]
  %s5 = inlined_call_operand.vmem [shape: f32[1,128], index: 5, kind: input, shape index: {}]
  %s6 = inlined_call_operand.hbm [shape: f32[128,128], index: 6, kind: input, shape index: {}]
  %s7 = inlined_call_operand.vmem [shape: f32[1,128], index: 7, kind: input, shape index: {}]
  %s8 = inlined_call_operand.vmem [shape: f32[8,128], index: 8, kind: output, shape index: {}]
  %s9 = sld [smem:[#allocation0]]
  $region58: #{_lambda_.1} parent=0
    _
  %s11 = ssub.s32 1, %s9
  %s12 = scalar_select 0, %s11, %s9
  $region1: #{_lambda_.1} parent=0
    #allocation2 [shape = 'u8[65536]{0}', space=vmem, size = 0x10000, scoped, tag = 'input window, operand 1, single buffered']
    #allocation3 [shape = 's32[1]{0}', space=sflag, size = 0x4, scoped, tag = 'scoped memory for _lambda_.1']
    #allocation4 [shape = 'u8[65536]{0}', space=vmem, size = 0x10000, scoped, tag = 'input window, operand 2, single buffered']
    #allocation5 [shape = 's32[1]{0}', space=sflag, size = 0x4, scoped, tag = 'scoped memory for _lambda_.1']
    #allocation6 [shape = 'u8[65536]{0}', space=vmem, size = 0x10000, scoped, tag = 'input window, operand 4, single buffered']
    #allocation7 [shape = 'u8[65536]{0}', space=vmem, size = 0x10000, scoped, tag = 'input window, operand 6, single buffered']
    #allocation8 [shape = 's32[1]{0}', space=sflag, size = 0x4, scoped, tag = 'scoped memory for _lambda_.1']
    %13 = vsyncpa [#allocation3], 0
    %14 = vsyncpa [#allocation5], 0
    %15 = vsyncpa [#allocation8], 0
    // Predicated region
    $region2: #{_lambda_.1} parent=1 // pred_check
      _
    $region3: #{_lambda_.1} parent=1 // pred_check_branch
      %17 = sbr.rel (0) target = $region5
    $region4: #{_lambda_.1} parent=1 // pred_region
      _
    $region5: #{_lambda_.1} parent=1 // pred_fallthru
      _
    // Predicated region
    $region6: #{_lambda_.1} parent=1 // pred_check
      _
    $region7: #{_lambda_.1} parent=1 // pred_check_branch
      %19 = sbr.rel (0) target = $region9
    $region8: #{_lambda_.1} parent=1 // pred_region
      %21 = vsyncadd [#allocation3], 0
      %s22 = sshll.u32 %s1, 4
      %s23 = int_to_ptr.hbm [resolvable:$true] %s22
      %s24 = sshll.u32 [#allocation2], 4
      %s25 = int_to_ptr.vmem [resolvable:$true] %s24
      %30 = dma.hbm_to_vmem [thread:$0]  %s23, 2048, %s25, [#allocation3], 128, 128, 8
    $region9: #{_lambda_.1} parent=1 // pred_fallthru
      _
    // Predicated region
    $region10: #{_lambda_.1} parent=1 // pred_check
      _
    $region11: #{_lambda_.1} parent=1 // pred_check_branch
      %32 = sbr.rel (0) target = $region13
    $region12: #{_lambda_.1} parent=1 // pred_region
      %34 = vsyncadd [#allocation5], 0
      %s35 = sshll.u32 %s2, 4
      %s36 = int_to_ptr.hbm [resolvable:$true] %s35
      %s37 = sshll.u32 [#allocation4], 4
      %s38 = int_to_ptr.vmem [resolvable:$true] %s37
      %43 = dma.hbm_to_vmem [thread:$0]  %s36, 2048, %s38, [#allocation5], 128, 128, 8
    $region13: #{_lambda_.1} parent=1 // pred_fallthru
      _
    // Predicated region
    $region14: #{_lambda_.1} parent=1 // pred_check
      _
    $region15: #{_lambda_.1} parent=1 // pred_check_branch
      %45 = sbr.rel (0) target = $region17
    $region16: #{_lambda_.1} parent=1 // pred_region
      _
    $region17: #{_lambda_.1} parent=1 // pred_fallthru
      _
    // Predicated region
    $region18: #{_lambda_.1} parent=1 // pred_check
      _
    $region19: #{_lambda_.1} parent=1 // pred_check_branch
      %47 = sbr.rel (0) target = $region21
    $region20: #{_lambda_.1} parent=1 // pred_region
      %49 = vsyncadd [#allocation5], 0
      %s50 = sshll.u32 %s4, 4
      %s51 = int_to_ptr.hbm [resolvable:$true] %s50
      %s52 = sshll.u32 [#allocation6], 4
      %s53 = int_to_ptr.vmem [resolvable:$true] %s52
      %58 = dma.hbm_to_vmem [thread:$0]  %s51, 2048, %s53, [#allocation5], 128, 128, 8
    $region21: #{_lambda_.1} parent=1 // pred_fallthru
      _
    // Predicated region
    $region22: #{_lambda_.1} parent=1 // pred_check
      _
    $region23: #{_lambda_.1} parent=1 // pred_check_branch
      %60 = sbr.rel (0) target = $region25
    $region24: #{_lambda_.1} parent=1 // pred_region
      _
    $region25: #{_lambda_.1} parent=1 // pred_fallthru
      _
    // Predicated region
    $region26: #{_lambda_.1} parent=1 // pred_check
      _
    $region27: #{_lambda_.1} parent=1 // pred_check_branch
      %62 = sbr.rel (0) target = $region29
    $region28: #{_lambda_.1} parent=1 // pred_region
      %64 = vsyncadd [#allocation8], 0
      %s65 = sshll.u32 %s6, 4
      %s66 = int_to_ptr.hbm [resolvable:$true] %s65
      %s67 = sshll.u32 [#allocation7], 4
      %s68 = int_to_ptr.vmem [resolvable:$true] %s67
      %73 = dma.hbm_to_vmem [thread:$0]  %s66, 2048, %s68, [#allocation8], 128, 128, 8
    $region29: #{_lambda_.1} parent=1 // pred_fallthru
      _
    // Predicated region
    $region30: #{_lambda_.1} parent=1 // pred_check
      _
    $region31: #{_lambda_.1} parent=1 // pred_check_branch
      %75 = sbr.rel (0) target = $region33
    $region32: #{_lambda_.1} parent=1 // pred_region
      _
    $region33: #{_lambda_.1} parent=1 // pred_fallthru
      _
    // Predicated region
    $region34: #{_lambda_.1} parent=1 // pred_check
      _
    $region35: #{_lambda_.1} parent=1 // pred_check_branch
      %77 = sbr.rel (0) target = $region37
    $region36: #{_lambda_.1} parent=1 // pred_region
      %79 = dma.done [#allocation3], 2048
    $region37: #{_lambda_.1} parent=1 // pred_fallthru
      _
    // Predicated region
    $region38: #{_lambda_.1} parent=1 // pred_check
      _
    $region39: #{_lambda_.1} parent=1 // pred_check_branch
      %81 = sbr.rel (0) target = $region41
    $region40: #{_lambda_.1} parent=1 // pred_region
      %83 = dma.done [#allocation5], 2048
    $region41: #{_lambda_.1} parent=1 // pred_fallthru
      _
    // Predicated region
    $region42: #{_lambda_.1} parent=1 // pred_check
      _
    $region43: #{_lambda_.1} parent=1 // pred_check_branch
      %85 = sbr.rel (0) target = $region45
    $region44: #{_lambda_.1} parent=1 // pred_region
      %87 = dma.done [#allocation5], 2048
    $region45: #{_lambda_.1} parent=1 // pred_fallthru
      _
    // Predicated region
    $region46: #{_lambda_.1} parent=1 // pred_check
      _
    $region47: #{_lambda_.1} parent=1 // pred_check_branch
      %89 = sbr.rel (0) target = $region49
    $region48: #{_lambda_.1} parent=1 // pred_region
      %91 = dma.done [#allocation8], 2048
    $region49: #{_lambda_.1} parent=1 // pred_fallthru
      _
    %v92 = vld [vmem:[%s0] sm:$0xff]
    %v93 = vlaneseq
    %v94 = vand.u32 %v93, 127
    %vm95 = vcmp.lt.s32.totalorder %v94, 8
    %vm96 = vcmp.eq.s32.totalorder %v92, 0
    %vm97 = vmand %vm96, %vm95
    %v98 = vsel %vm97, 1, 0
    %v99 = vand.u32 %v98, 65535
    %v100 = vshrl.u32 %v98, 16
    %v101 = vcvt.s32.f32 %v99
    %v102 = vcvt.s32.f32 %v100
    %103 = vadd.xlane.f32.xlu0 %v101
    %v104 = vpop.xlane.xlu0 %103
    %105 = vadd.xlane.f32.xlu0 %v102
    %v106 = vpop.xlane.xlu0 %105
    %v107 = vcvt.f32.s32 %v104
    %v108 = vcvt.f32.s32 %v106
    %v109 = vshll.u32 %v108, 16
    %v110 = vadd.s32 %v109, %v107
    %v111 = vsub.s32 8, %v110
    %vm112 = vcmp.gt.s32.totalorder %v111, 0
    %v113 = vsub.s32 %v111, 1
    %v114 = vsel %vm112, %v113, 7
    %vm115 = vcmp.eq.s32.totalorder %v94, %v114
    %vm116 = vmand %vm115, %vm95
    %v117 = vsel %vm116, %v92, 0
    %v118 = vand.u32 %v117, 65535
    %v119 = vshrl.u32 %v117, 16
    %v120 = vcvt.s32.f32 %v118
    %v121 = vcvt.s32.f32 %v119
    %122 = vadd.xlane.f32.xlu0 %v120
    %v123 = vpop.xlane.xlu0 %122
    %124 = vadd.xlane.f32.xlu0 %v121
    %v125 = vpop.xlane.xlu0 %124
    %v126 = vcvt.f32.s32 %v123
    %v127 = vcvt.f32.s32 %v125
    %v128 = vshll.u32 %v127, 16
    %v129 = vadd.s32 %v128, %v126
    %vm130 = vcmp.eq.s32.totalorder %v94, %v129
    %v131 = vsel %vm130, 1, 0
    %v132 = vcvt.s32.f32 %v131
    %v133 = vld [vmem:[#allocation2] sm:$0xff]
    %v134 = vld [vmem:[#allocation2 + $0x8] sm:$0xff]
    %v135 = vld [vmem:[#allocation2 + $0x10] sm:$0xff]
    %v136 = vld [vmem:[#allocation2 + $0x18] sm:$0xff]
    %v137 = vld [vmem:[#allocation2 + $0x20] sm:$0xff]
    %v138 = vld [vmem:[#allocation2 + $0x28] sm:$0xff]
    %v139 = vld [vmem:[#allocation2 + $0x30] sm:$0xff]
    %v140 = vld [vmem:[#allocation2 + $0x38] sm:$0xff]
    %v141 = vld [vmem:[#allocation2 + $0x40] sm:$0xff]
    %v142 = vld [vmem:[#allocation2 + $0x48] sm:$0xff]
    %v143 = vld [vmem:[#allocation2 + $0x50] sm:$0xff]
    %v144 = vld [vmem:[#allocation2 + $0x58] sm:$0xff]
    %v145 = vld [vmem:[#allocation2 + $0x60] sm:$0xff]
    %v146 = vld [vmem:[#allocation2 + $0x68] sm:$0xff]
    %v147 = vld [vmem:[#allocation2 + $0x70] sm:$0xff]
    %v148 = vld [vmem:[#allocation2 + $0x78] sm:$0xff]
    %149 = vmatpush.msra.mxu0 %v148
    %150 = vmatpush.msra.mxu0 %v147
    %151 = vmatpush.msra.mxu0 %v146
    %152 = vmatpush.msra.mxu0 %v145
    %153 = vmatpush.msra.mxu0 %v144
    %154 = vmatpush.msra.mxu0 %v143
    %155 = vmatpush.msra.mxu0 %v142
    %156 = vmatpush.msra.mxu0 %v141
    %157 = vmatpush.msra.mxu0 %v140
    %158 = vmatpush.msra.mxu0 %v139
    %159 = vmatpush.msra.mxu0 %v138
    %160 = vmatpush.msra.mxu0 %v137
    %161 = vmatpush.msra.mxu0 %v136
    %162 = vmatpush.msra.mxu0 %v135
    %163 = vmatpush.msra.mxu0 %v134
    %164 = vmatpush.msra.mxu0 %v133
    %165 = vmatmul.f32.gmra.mxu0 %v132
    %v166 = vpop.f32.mrf.mxu0
    %v167 = vadd.f32 0.0, %v166
    %168 = vdwg.mxu0
    %v169 = vld [vmem:[#allocation4] sm:$0xff]
    %v170 = vld [vmem:[#allocation4 + $0x8] sm:$0xff]
    %v171 = vld [vmem:[#allocation4 + $0x10] sm:$0xff]
    %v172 = vld [vmem:[#allocation4 + $0x18] sm:$0xff]
    %v173 = vld [vmem:[#allocation4 + $0x20] sm:$0xff]
    %v174 = vld [vmem:[#allocation4 + $0x28] sm:$0xff]
    %v175 = vld [vmem:[#allocation4 + $0x30] sm:$0xff]
    %v176 = vld [vmem:[#allocation4 + $0x38] sm:$0xff]
    %v177 = vld [vmem:[#allocation4 + $0x40] sm:$0xff]
    %v178 = vld [vmem:[#allocation4 + $0x48] sm:$0xff]
    %v179 = vld [vmem:[#allocation4 + $0x50] sm:$0xff]
    %v180 = vld [vmem:[#allocation4 + $0x58] sm:$0xff]
    %v181 = vld [vmem:[#allocation4 + $0x60] sm:$0xff]
    %v182 = vld [vmem:[#allocation4 + $0x68] sm:$0xff]
    %v183 = vld [vmem:[#allocation4 + $0x70] sm:$0xff]
    %v184 = vld [vmem:[#allocation4 + $0x78] sm:$0xff]
    %v185 = vld [vmem:[%s3] sm:$0x1]
    %v187 = vperm.slane %v185, 0
    %189 = vmatpush.msra.mxu0 %v184
    %190 = vmatpush.msra.mxu0 %v183
    %191 = vmatpush.msra.mxu0 %v182
    %192 = vmatpush.msra.mxu0 %v181
    %193 = vmatpush.msra.mxu0 %v180
    %194 = vmatpush.msra.mxu0 %v179
    %195 = vmatpush.msra.mxu0 %v178
    %196 = vmatpush.msra.mxu0 %v177
    %197 = vmatpush.msra.mxu0 %v176
    %198 = vmatpush.msra.mxu0 %v175
    %199 = vmatpush.msra.mxu0 %v174
    %200 = vmatpush.msra.mxu0 %v173
    %201 = vmatpush.msra.mxu0 %v172
    %202 = vmatpush.msra.mxu0 %v171
    %203 = vmatpush.msra.mxu0 %v170
    %204 = vmatpush.msra.mxu0 %v169
    %205 = vmatmul.f32.gmra.mxu0 %v167
    %v206 = vpop.f32.mrf.mxu0
    %v207 = vadd.f32 %v187, %v206
    %208 = vdwg.mxu0
    %v209 = vtanh.pop %v207
    %v210 = vld [vmem:[#allocation6] sm:$0xff]
    %v211 = vld [vmem:[#allocation6 + $0x8] sm:$0xff]
    %v212 = vld [vmem:[#allocation6 + $0x10] sm:$0xff]
    %v213 = vld [vmem:[#allocation6 + $0x18] sm:$0xff]
    %v214 = vld [vmem:[#allocation6 + $0x20] sm:$0xff]
    %v215 = vld [vmem:[#allocation6 + $0x28] sm:$0xff]
    %v216 = vld [vmem:[#allocation6 + $0x30] sm:$0xff]
    %v217 = vld [vmem:[#allocation6 + $0x38] sm:$0xff]
    %v218 = vld [vmem:[#allocation6 + $0x40] sm:$0xff]
    %v219 = vld [vmem:[#allocation6 + $0x48] sm:$0xff]
    %v220 = vld [vmem:[#allocation6 + $0x50] sm:$0xff]
    %v221 = vld [vmem:[#allocation6 + $0x58] sm:$0xff]
    %v222 = vld [vmem:[#allocation6 + $0x60] sm:$0xff]
    %v223 = vld [vmem:[#allocation6 + $0x68] sm:$0xff]
    %v224 = vld [vmem:[#allocation6 + $0x70] sm:$0xff]
    %v225 = vld [vmem:[#allocation6 + $0x78] sm:$0xff]
    %v226 = vld [vmem:[%s5] sm:$0x1]
    %v228 = vperm.slane %v226, 0
    %230 = vmatpush.msra.mxu0 %v225
    %231 = vmatpush.msra.mxu0 %v224
    %232 = vmatpush.msra.mxu0 %v223
    %233 = vmatpush.msra.mxu0 %v222
    %234 = vmatpush.msra.mxu0 %v221
    %235 = vmatpush.msra.mxu0 %v220
    %236 = vmatpush.msra.mxu0 %v219
    %237 = vmatpush.msra.mxu0 %v218
    %238 = vmatpush.msra.mxu0 %v217
    %239 = vmatpush.msra.mxu0 %v216
    %240 = vmatpush.msra.mxu0 %v215
    %241 = vmatpush.msra.mxu0 %v214
    %242 = vmatpush.msra.mxu0 %v213
    %243 = vmatpush.msra.mxu0 %v212
    %244 = vmatpush.msra.mxu0 %v211
    %245 = vmatpush.msra.mxu0 %v210
    %246 = vmatmul.f32.gmra.mxu0 %v209
    %v247 = vpop.f32.mrf.mxu0
    %v248 = vadd.f32 %v228, %v247
    %249 = vdwg.mxu0
    %v250 = vxor.u32 %v248, 2147483648
    %v251 = vmul.f32 %v250, 1.442695
    %v252 = vpow.pop %v251
    %v253 = vadd.f32 %v252, 1.0
    %v254 = vrcp.pop %v253
    %v255 = vmul.f32 %v253, %v254
    %v256 = vsub.f32 1.0, %v255
    %v257 = vmul.f32 %v254, %v256
    %v258 = vadd.f32 %v254, %v257
    %vm259 = vweird.f32 %v253
    %vm260 = vweird.f32 %v254
    %vm261 = vmor %vm259, %vm260
    %v262 = vsel %vm261, %v254, %v258
    %v263 = vand.u32 2147483647, %v253
    %vm264 = vcmp.eq.f32.partialorder %v263, 8.507059e+37
    %v265 = vand.u32 %v253, 2147483648
    %v266 = vor.u32 1.1754944e-38, %v265
    %v267 = vsel %vm264, %v266, %v262
    %v268 = vmul.f32 1.0, %v267
    %v269 = vld [vmem:[#allocation7] sm:$0xff]
    %v270 = vld [vmem:[#allocation7 + $0x8] sm:$0xff]
    %v271 = vld [vmem:[#allocation7 + $0x10] sm:$0xff]
    %v272 = vld [vmem:[#allocation7 + $0x18] sm:$0xff]
    %v273 = vld [vmem:[#allocation7 + $0x20] sm:$0xff]
    %v274 = vld [vmem:[#allocation7 + $0x28] sm:$0xff]
    %v275 = vld [vmem:[#allocation7 + $0x30] sm:$0xff]
    %v276 = vld [vmem:[#allocation7 + $0x38] sm:$0xff]
    %v277 = vld [vmem:[#allocation7 + $0x40] sm:$0xff]
    %v278 = vld [vmem:[#allocation7 + $0x48] sm:$0xff]
    %v279 = vld [vmem:[#allocation7 + $0x50] sm:$0xff]
    %v280 = vld [vmem:[#allocation7 + $0x58] sm:$0xff]
    %v281 = vld [vmem:[#allocation7 + $0x60] sm:$0xff]
    %v282 = vld [vmem:[#allocation7 + $0x68] sm:$0xff]
    %v283 = vld [vmem:[#allocation7 + $0x70] sm:$0xff]
    %v284 = vld [vmem:[#allocation7 + $0x78] sm:$0xff]
    %v285 = vld [vmem:[%s7] sm:$0x1]
    %v287 = vperm.slane %v285, 0
    %289 = vmatpush.msra.mxu0 %v284
    %290 = vmatpush.msra.mxu0 %v283
    %291 = vmatpush.msra.mxu0 %v282
    %292 = vmatpush.msra.mxu0 %v281
    %293 = vmatpush.msra.mxu0 %v280
    %294 = vmatpush.msra.mxu0 %v279
    %295 = vmatpush.msra.mxu0 %v278
    %296 = vmatpush.msra.mxu0 %v277
    %297 = vmatpush.msra.mxu0 %v276
    %298 = vmatpush.msra.mxu0 %v275
    %299 = vmatpush.msra.mxu0 %v274
    %300 = vmatpush.msra.mxu0 %v273
    %301 = vmatpush.msra.mxu0 %v272
    %302 = vmatpush.msra.mxu0 %v271
    %303 = vmatpush.msra.mxu0 %v270
    %304 = vmatpush.msra.mxu0 %v269
    %305 = vmatmul.f32.gmra.mxu0 %v268
    %v306 = vpop.f32.mrf.mxu0
    %v307 = vadd.f32 %v287, %v306
    %308 = vdwg.mxu0
    %309 = vst [vmem:[%s8] sm:$0xff] %v307
    // Predicated region
    $region50: #{_lambda_.1} parent=1 // pred_check
      _
    $region51: #{_lambda_.1} parent=1 // pred_check_branch
      %311 = sbr.rel (0) target = $region53
    $region52: #{_lambda_.1} parent=1 // pred_region
      _
    $region53: #{_lambda_.1} parent=1 // pred_fallthru
      _
    // Predicated region
    $region54: #{_lambda_.1} parent=1 // pred_check
      _
    $region55: #{_lambda_.1} parent=1 // pred_check_branch
      %313 = sbr.rel (0) target = $region57
    $region56: #{_lambda_.1} parent=1 // pred_region
      _
    $region57: #{_lambda_.1} parent=1 // pred_fallthru
      _
    %314 = vsyncpa [#allocation3], 1
    %315 = vsyncpa [#allocation5], 1
    %316 = vsyncpa [#allocation8], 1

</llo_original>
